<compile_context>
chip_gen: v7x
topology: tpu7x:2x2x1
jax: 0.10.0
libtpu: 0.0.40
codegen_flags: <defaults>
</compile_context>

<pallas_src>
import jax
import jax.numpy as jnp
from jax.experimental import pallas as pl
from jax.experimental.pallas import tpu as pltpu


# FastGelu (formula == 4) constants, with the two scalar multiplies folded:
#   x * 0.7978845608 * (1 + 0.044715 * x * x)  ==  x * (_C1 + _C2 * x * x)
_C1 = 0.7978845608
_C2 = 0.7978845608 * 0.044715  # 0.03567740808...


def _gelu_kernel(x_ref, o_ref):
    # NOTE: the last grid block may be ragged; its out-of-range rows hold garbage.
    # That is fine only because Pallas masks the edge writes -- never rely on them.
    x = x_ref[...]
    # forward() semantics: fp16 -> compute in fp32, cast back; everything else
    # (f32 / bf16) computes natively, exactly like the PyTorch module.
    compute_dtype = jnp.float32 if x_ref.dtype == jnp.float16 else x_ref.dtype
    xf = x.astype(compute_dtype)
    inner = xf * (_C1 + _C2 * (xf * xf))   # 3 mul + 1 add (VALU-trimmed)
    t = 0.5 * xf
    y = t + t * jnp.tanh(inner)            # tanh goes to the EUP slot
    o_ref[...] = y.astype(o_ref.dtype)


def _lane_dense_view(x):
    """Zero-copy 2-D (rows, cols) view of x, as lane-dense as possible.

    Returns (view, tail_pad). tail_pad is 0 except for the rare 0/1-D,
    not-multiple-of-128 fallback.
    """
    n = x.size
    if n % 128 == 0:
        # Largest convenient lane width (multiple of 128) that divides n: full,
        # unmasked 128-lane stores and a pure (bitcast-level) reshape.
        for lw in (2048, 1024, 512, 384, 256, 128):
            if n % lw == 0:
                return x.reshape(n // lw, lw), 0
    if x.ndim >= 2:
        # Keep the natural trailing dim as lanes: stores may be masked when the
        # last dim < 128, but there are NO extra HBM pad/slice round trips.
        return x.reshape(-1, x.shape[-1]), 0
    # Rare: 0/1-D input whose size is not a multiple of 128 -> tiny tail pad.
    pad = 128 - (n % 128)
    flat = jnp.pad(x.reshape(-1), (0, pad))
    return flat.reshape(-1, 128), pad


def _choose_block_rows(rows, cols, itemsize, *, target_block_bytes, min_steps,
                       min_split_bytes=256 * 1024):
    """Pick block rows: constant-byte (~target) blocks, sublane-aligned, with an
    (ideally even) multi-step grid so pipelining and v7x 2-TC sharding kick in."""
    # Packed-layout sublane alignment: 8 (32-bit), 16 (16-bit), 32 (8-bit).
    row_align = 8 * max(1, 4 // itemsize)
    total_bytes = rows * cols * itemsize
    if rows <= 2 * row_align or total_bytes <= min_split_bytes:
        return rows  # tiny tensor: one full-extent block (always legal)
    row_bytes = cols * itemsize
    br_target = max(row_align,
                    (target_block_bytes // row_bytes) // row_align * row_align)
    steps = max(min_steps, pl.cdiv(rows, br_target))
    steps = pl.cdiv(steps, 2) * 2  # even (best effort): both v7x TCs get work
    br = pl.cdiv(pl.cdiv(rows, steps), row_align) * row_align
    return min(br, rows)


def gelu_pallas(x, *, target_block_bytes=4 * 1024 * 1024, min_steps=4):
    """FastGelu (formula=4). Returns a 1-tuple, mirroring the PyTorch forward()."""
    orig_shape = x.shape
    n = x.size
    if n == 0:
        return (x,)

    x2, tail_pad = _lane_dense_view(x)
    rows, cols = x2.shape
    itemsize = jnp.dtype(x.dtype).itemsize
    br = _choose_block_rows(rows, cols, itemsize,
                            target_block_bytes=target_block_bytes,
                            min_steps=min_steps)
    grid = (pl.cdiv(rows, br),)  # ragged last block: edge writes are masked

    out = pl.pallas_call(
        _gelu_kernel,
        out_shape=jax.ShapeDtypeStruct((rows, cols), x.dtype),
        grid_spec=pltpu.PrefetchScalarGridSpec(
            num_scalar_prefetch=0,
            grid=grid,
            in_specs=[pl.BlockSpec((br, cols), lambda i: (i, 0))],
            out_specs=pl.BlockSpec((br, cols), lambda i: (i, 0)),
        ),
        compiler_params=pltpu.CompilerParams(
            dimension_semantics=("parallel",),  # v7x shards the grid over 2 TCs
            # ~4 MiB blocks x (in + out) x double-buffering = 16 MiB of buffers;
            # raise the scoped limit so this is safe on v5e's 16 MiB default
            # while staying well under v7x's 64 MiB physical VMEM.
            vmem_limit_bytes=32 * 1024 * 1024,
        ),
    )(x2)

    if tail_pad:
        out = out.reshape(-1)[:n]
    return (out.reshape(orig_shape),)


def _gelu_ref(x):
    xf = x.astype(jnp.float32)
    y = 0.5 * xf * (1.0 + jnp.tanh(xf * 0.7978845608 * (1.0 + 0.044715 * xf * xf)))
    return y.astype(x.dtype)


if __name__ == "__main__":
    key = jax.random.PRNGKey(0)

    # 1) Small (batch=2, seq=8, hidden=32) f32 -- lane-dense single-block path.
    x = jax.random.normal(key, (2, 8, 32), dtype=jnp.float32)
    (y,) = gelu_pallas(x)
    y = jax.block_until_ready(y)
    assert y.shape == x.shape and y.dtype == x.dtype
    assert jnp.allclose(y, _gelu_ref(x), atol=1e-5, rtol=1e-5)

    # 2) fp16 path (compute in fp32, cast back), as in forward().
    x16 = x.astype(jnp.float16)
    (y16,) = gelu_pallas(x16)
    y16 = jax.block_until_ready(y16)
    assert y16.dtype == jnp.float16
    assert jnp.allclose(y16.astype(jnp.float32), _gelu_ref(x16).astype(jnp.float32),
                        atol=1e-3, rtol=1e-3)

    # 3) Medium (4, 96, 768) f32 -- no pad/slice, even multi-step pipelined grid
    #    with a ragged (masked) last block.
    xb = jax.random.normal(jax.random.PRNGKey(1), (4, 96, 768), dtype=jnp.float32)
    (yb,) = gelu_pallas(xb)
    yb = jax.block_until_ready(yb)
    assert yb.shape == xb.shape
    assert jnp.allclose(yb, _gelu_ref(xb), atol=1e-5, rtol=1e-5)

    # 4) bf16 native-compute path (forward() computes non-fp16 dtypes natively).
    xbf = xb.astype(jnp.bfloat16)
    (ybf,) = gelu_pallas(xbf)
    ybf = jax.block_until_ready(ybf)
    assert ybf.dtype == jnp.bfloat16
    assert jnp.allclose(ybf.astype(jnp.float32), _gelu_ref(xbf).astype(jnp.float32),
                        atol=5e-2, rtol=5e-2)

    # 5) Non-multiple-of-128 numel (3, 7, 100) -> masked-lane fallback, no pad/slice.
    xr = jax.random.normal(jax.random.PRNGKey(2), (3, 7, 100), dtype=jnp.float32)
    (yr,) = gelu_pallas(xr)
    yr = jax.block_until_ready(yr)
    assert yr.shape == xr.shape
    assert jnp.allclose(yr, _gelu_ref(xr), atol=1e-5, rtol=1e-5)

    print("KERNEL_OK")
</pallas_src>

<mosaic_0001>
module attributes {stable_mosaic.version = 11 : i64} {
  func.func @_gelu_kernel(%arg0: i32, %arg1: memref<1x512xf32, #tpu.memory_space<vmem>>, %arg2: memref<1x512xf32, #tpu.memory_space<vmem>>) attributes {dimension_semantics = [#tpu.dimension_semantics<parallel>], iteration_bounds = array<i64: 1>, scalar_prefetch = 0 : i64, scratch_operands = 0 : i64, tpu.core_type = #tpu.core_type<tc>, window_params = [{transform_indices = @transform_0, window_bounds = array<i64: 1, 512>}, {transform_indices = @transform_1, window_bounds = array<i64: 1, 512>}]} {
    %c0 = arith.constant 0 : index
    %c0_0 = arith.constant 0 : index
    %0 = vector.load %arg1[%c0, %c0_0] : memref<1x512xf32, #tpu.memory_space<vmem>>, vector<1x512xf32>
    %1 = arith.mulf %0, %0 : vector<1x512xf32>
    %cst = arith.constant 0.0356774069 : f32
    %2 = vector.broadcast %cst : f32 to vector<1x512xf32>
    %3 = arith.mulf %2, %1 : vector<1x512xf32>
    %cst_1 = arith.constant 0.797884583 : f32
    %4 = vector.broadcast %cst_1 : f32 to vector<1x512xf32>
    %5 = arith.addf %4, %3 : vector<1x512xf32>
    %6 = arith.mulf %0, %5 : vector<1x512xf32>
    %cst_2 = arith.constant 5.000000e-01 : f32
    %7 = vector.broadcast %cst_2 : f32 to vector<1x512xf32>
    %8 = arith.mulf %7, %0 : vector<1x512xf32>
    %9 = math.tanh %6 : vector<1x512xf32>
    %10 = arith.mulf %8, %9 : vector<1x512xf32>
    %11 = arith.addf %8, %10 : vector<1x512xf32>
    %c0_3 = arith.constant 0 : index
    %c0_4 = arith.constant 0 : index
    %12 = vector.load %arg2[%c0_3, %c0_4] : memref<1x512xf32, #tpu.memory_space<vmem>>, vector<1x512xf32>
    tpu.vector_store %arg2[%c0_3, %c0_4], %11 {strides = array<i32>} : memref<1x512xf32, #tpu.memory_space<vmem>>, vector<1x512xf32>,
    return
  }
  func.func @transform_0(%arg0: i32) -> (i32, i32) {
    %c0_i32 = arith.constant 0 : i32
    %c0_i32_0 = arith.constant 0 : i32
    return %arg0, %c0_i32 : i32, i32
  }
  func.func @transform_1(%arg0: i32) -> (i32, i32) {
    %c0_i32 = arith.constant 0 : i32
    %c0_i32_0 = arith.constant 0 : i32
    return %arg0, %c0_i32 : i32, i32
  }
}

</mosaic_0001>

<llo_original>
// kernel: tpu_custom_call.1
$region0: #{tpu_custom_call.1}
  #allocation0 [shape = 'u32[]', space=smem, size = 0x4, offset = 0x4, fixed_abs, tag = 'smem constant byte address 0x4 - core index']
  #allocation1 [shape = 'u32[144,128]{1,0:T(1,128)}', space=vmem, size = 0x12000, scoped, tag = 'internal scratch']
  %s0 = inlined_call_operand.hbm [shape: f32[1,512], index: 0, kind: input, shape index: {}]
  %s1 = inlined_call_operand.hbm [shape: f32[1,512], index: 1, kind: output, shape index: {}]
  %s2 = sld [smem:[#allocation0]]
  $region18: #{tpu_custom_call.1} parent=0
    _
  %s4 = ssub.s32 1, %s2
  %s5 = scalar_select 0, %s4, %s2
  $region1: #{tpu_custom_call.1} parent=0
    #allocation2 [shape = 'u8[2048]{0}', space=vmem, size = 0x800, scoped, tag = 'input window, operand 0, single buffered']
    #allocation3 [shape = 's32[1]{0}', space=sflag, size = 0x4, scoped, tag = 'scoped memory for tpu_custom_call.1']
    #allocation4 [shape = 's32[1]{0}', space=sflag, size = 0x4, scoped, tag = 'scoped memory for tpu_custom_call.1']
    #allocation5 [shape = 'u8[2048]{0}', space=vmem, size = 0x800, scoped, tag = 'output window, operand 0, single buffered']
    %6 = vsyncpa [#allocation3], 0
    %7 = vsyncpa [#allocation4], 0
    // Predicated region
    $region2: #{tpu_custom_call.1} parent=1 // pred_check
      _
    $region3: #{tpu_custom_call.1} parent=1 // pred_check_branch
      %9 = sbr.rel (0) target = $region5
    $region4: #{tpu_custom_call.1} parent=1 // pred_region
      %s11 = ssub.s32 64, 64
      %12 = vsyncadd [#allocation3], %s11
      %s14 = sshll.u32 [#allocation2], 4
      %s15 = int_to_ptr.vmem [resolvable:$true] %s14
      %17 = dma.hbm_to_vmem [thread:$0]  %s0, 64, %s15, [#allocation3]
    $region5: #{tpu_custom_call.1} parent=1 // pred_fallthru
      _
    // Predicated region
    $region6: #{tpu_custom_call.1} parent=1 // pred_check
      _
    $region7: #{tpu_custom_call.1} parent=1 // pred_check_branch
      %19 = sbr.rel (0) target = $region9
    $region8: #{tpu_custom_call.1} parent=1 // pred_region
      %20 = dma.done [#allocation3], 64
    $region9: #{tpu_custom_call.1} parent=1 // pred_fallthru
      _
    %v21 = vld [vmem:[#allocation2] sm:$0xf]
    %v22 = vmul.f32 %v21, %v21
    %v23 = vmul.f32 %v22, 0.035677407
    %v24 = vadd.f32 %v23, 0.7978846
    %v25 = vmul.f32 %v21, %v24
    %v26 = vmul.f32 %v21, 0.5
    %v27 = vtanh.pop %v25
    %v28 = vmul.f32 %v26, %v27
    %v29 = vadd.f32 %v26, %v28
    %v30 = vlaneseq
    %vm31 = vcmp.ge.s32.totalorder %v30, 0
    %vm32 = vcmp.lt.s32.totalorder %v30, 512
    %vm33 = vmand %vm31, %vm32
    %34 = vst.msk [vmem:[#allocation5] sm:$0xf] %vm33, %v29
    // Predicated region
    $region10: #{tpu_custom_call.1} parent=1 // pred_check
      _
    $region11: #{tpu_custom_call.1} parent=1 // pred_check_branch
      %36 = sbr.rel (0) target = $region13
    $region12: #{tpu_custom_call.1} parent=1 // pred_region
      %s38 = ssub.s32 64, 64
      %39 = vsyncadd [#allocation4], %s38
      %s41 = sshll.u32 [#allocation5], 4
      %s42 = int_to_ptr.vmem [resolvable:$true] %s41
      %44 = dma.vmem_to_hbm [thread:$0]  %s42, 64, %s1, [#allocation4]
    $region13: #{tpu_custom_call.1} parent=1 // pred_fallthru
      _
    // Predicated region
    $region14: #{tpu_custom_call.1} parent=1 // pred_check
      _
    $region15: #{tpu_custom_call.1} parent=1 // pred_check_branch
      %46 = sbr.rel (0) target = $region17
    $region16: #{tpu_custom_call.1} parent=1 // pred_region
      %47 = dma.done [#allocation4], 64
    $region17: #{tpu_custom_call.1} parent=1 // pred_fallthru
      _
    %48 = vsyncpa [#allocation3], 1
    %49 = vsyncpa [#allocation4], 1

</llo_original>
